<compile_context>
chip_gen: v5e
topology: v5e:2x2
jax: 0.10.0
libtpu: 0.0.40
codegen_flags: <defaults>
</compile_context>

<pallas_src>
import numpy as np
import jax
import jax.numpy as jnp
from jax.experimental import pallas as pl
from jax.experimental.pallas import tpu as pltpu


def cf_kernel(mw_ref, uw_ref, b_ref, o_ref):
    """Row-wise dot over features plus combined bias, one batch tile.

    mw_ref, uw_ref: (tb, F) f32   -- natural gather layout (no transpose)
    b_ref, o_ref:   (tb, 1) f32
    """
    prod = mw_ref[...] * uw_ref[...]                      # VPU elementwise
    dots = jnp.sum(prod, axis=-1, keepdims=True)          # XLU minor-axis reduce
    o_ref[...] = dots + b_ref[...]


def _round_up(x, m):
    return (x + m - 1) // m * m


def _pick_vmem_limit():
    """Per-generation scoped-VMEM limit (v7x: 64 MiB physical, v5e/v6e: 128)."""
    try:
        cap = pltpu.get_tpu_info().vmem_capacity_bytes
    except Exception:
        cap = 64 * 1024 * 1024          # conservative: smallest per-core VMEM (v7x)
    # 3/4 of physical, never above ~96 MiB (review: ~48 MiB on v7x, ~100 on v5e/v6e).
    return int(min(cap * 3 // 4, 96 * 1024 * 1024))


def cf_forward(movie_idx, user_idx, movies_w, users_w, movies_b, users_b,
               *, tb_max=16384):
    """Replicates Model.forward: returns f32 tensor of shape movie_idx.shape."""
    B = movie_idx.shape[0]
    F = movies_w.shape[1]

    # ---- batch-tile selection ------------------------------------------------
    vmem_limit = _pick_vmem_limit()
    # Double-buffered per-row VMEM bytes (f32, minor dim padded to 128 lanes):
    #   2 weight streams (F padded to 128) + 1 bias stream + 1 output stream.
    f_pad = _round_up(F, 128)
    per_row = 2 * 4 * (2 * f_pad + 2 * 128)
    stream_budget = max(vmem_limit - 8 * 1024 * 1024, 4 * 1024 * 1024)
    tb_budget = max(128, stream_budget // per_row // 128 * 128)
    tb = min(tb_max, _round_up(B, 128), tb_budget)        # multiple of 128
    B_pad = _round_up(B, tb)

    # ---- gather glue (data-dependent row lookup stays in XLA) ---------------
    pad = B_pad - B
    if pad:
        movie_idx_p = jnp.pad(movie_idx, (0, pad))        # pad with index 0 (safe,
        user_idx_p = jnp.pad(user_idx, (0, pad))          # tail is sliced off below)
    else:
        movie_idx_p, user_idx_p = movie_idx, user_idx

    m_w = jnp.take(movies_w, movie_idx_p, axis=0)          # (B_pad, F), no transpose
    u_w = jnp.take(users_w, user_idx_p, axis=0)            # (B_pad, F)
    bias = (jnp.take(movies_b, movie_idx_p, axis=0)
            + jnp.take(users_b, user_idx_p, axis=0))[:, None]   # (B_pad, 1)

    # ---- Pallas kernel -------------------------------------------------------
    out = pl.pallas_call(
        cf_kernel,
        out_shape=jax.ShapeDtypeStruct((B_pad, 1), jnp.float32),
        grid_spec=pltpu.PrefetchScalarGridSpec(
            num_scalar_prefetch=0,
            grid=(B_pad // tb,),
            in_specs=[
                pl.BlockSpec((tb, F), lambda i: (i, 0)),
                pl.BlockSpec((tb, F), lambda i: (i, 0)),
                pl.BlockSpec((tb, 1), lambda i: (i, 0)),
            ],
            out_specs=pl.BlockSpec((tb, 1), lambda i: (i, 0)),
        ),
        compiler_params=pltpu.CompilerParams(
            dimension_semantics=("parallel",),
            vmem_limit_bytes=vmem_limit),
    )(m_w, u_w, bias)

    return out[:B, 0]                                      # shape (B,), like torch


def init_params(num_features, num_movies, num_users, seed, shift, scale):
    """Deterministic init, byte-for-byte matching the PyTorch __init__."""
    rng = np.random.default_rng(seed)
    c = 0.6
    movies_w = rng.normal(shift, scale, (num_movies, num_features)).clip(-c, c).astype(np.float32)
    users_w = rng.normal(shift, scale, (num_users, num_features)).clip(-c, c).astype(np.float32)
    movies_b = rng.normal(0, scale, (num_movies,)).clip(-c, c).astype(np.float32)
    users_b = rng.normal(0, scale, (num_users,)).clip(-c, c).astype(np.float32)
    return (jnp.asarray(movies_w), jnp.asarray(users_w),
            jnp.asarray(movies_b), jnp.asarray(users_b))


if __name__ == "__main__":
    # Small, forward-consistent shapes.
    num_features, num_movies, num_users = 32, 64, 48
    seed, shift, scale = 7, 0.0, 0.25

    movies_w, users_w, movies_b, users_b = init_params(
        num_features, num_movies, num_users, seed, shift, scale)

    key = jax.random.PRNGKey(0)

    def run_and_check(batch, tb_max):
        k_m, k_u = jax.random.split(jax.random.fold_in(key, batch))
        movie_idx = jax.random.randint(k_m, (batch,), 0, num_movies, dtype=jnp.int32)
        user_idx = jax.random.randint(k_u, (batch,), 0, num_users, dtype=jnp.int32)

        forward = jax.jit(lambda mi, ui: cf_forward(
            mi, ui, movies_w, users_w, movies_b, users_b, tb_max=tb_max))
        out = jax.block_until_ready(forward(movie_idx, user_idx))

        # Pure-JAX reference check of the forward semantics.
        ref = (jnp.sum(movies_w[movie_idx] * users_w[user_idx], axis=-1)
               + movies_b[movie_idx] + users_b[user_idx])
        np.testing.assert_allclose(np.asarray(out), np.asarray(ref),
                                   rtol=1e-5, atol=1e-5)

    run_and_check(batch=8, tb_max=16384)     # single-tile path (B padded to 128)
    run_and_check(batch=300, tb_max=128)     # multi-step grid path (3 tiles)

    print("KERNEL_OK")
</pallas_src>

<mosaic_0001>
module attributes {stable_mosaic.version = 11 : i64} {
  func.func @cf_kernel(%arg0: i32, %arg1: memref<128x32xf32, #tpu.memory_space<vmem>>, %arg2: memref<128x32xf32, #tpu.memory_space<vmem>>, %arg3: memref<128x1xf32, #tpu.memory_space<vmem>>, %arg4: memref<128x1xf32, #tpu.memory_space<vmem>>) attributes {dimension_semantics = [#tpu.dimension_semantics<parallel>], iteration_bounds = array<i64: 1>, scalar_prefetch = 0 : i64, scratch_operands = 0 : i64, tpu.core_type = #tpu.core_type<tc>, window_params = [{transform_indices = @transform_0, window_bounds = array<i64: 128, 32>}, {transform_indices = @transform_1, window_bounds = array<i64: 128, 32>}, {transform_indices = @transform_2, window_bounds = array<i64: 128, 1>}, {transform_indices = @transform_3, window_bounds = array<i64: 128, 1>}]} {
    %c0 = arith.constant 0 : index
    %c0_0 = arith.constant 0 : index
    %0 = vector.load %arg1[%c0, %c0_0] : memref<128x32xf32, #tpu.memory_space<vmem>>, vector<128x32xf32>
    %c0_1 = arith.constant 0 : index
    %c0_2 = arith.constant 0 : index
    %1 = vector.load %arg2[%c0_1, %c0_2] : memref<128x32xf32, #tpu.memory_space<vmem>>, vector<128x32xf32>
    %2 = arith.mulf %0, %1 : vector<128x32xf32>
    %cst = arith.constant dense<0.000000e+00> : vector<128xf32>
    %3 = vector.multi_reduction <add>, %2, %cst [1] : vector<128x32xf32> to vector<128xf32>
    %4 = vector.shape_cast %3 : vector<128xf32> to vector<128x1xf32>
    %c0_3 = arith.constant 0 : index
    %c0_4 = arith.constant 0 : index
    %5 = vector.load %arg3[%c0_3, %c0_4] : memref<128x1xf32, #tpu.memory_space<vmem>>, vector<128x1xf32>
    %6 = arith.addf %4, %5 : vector<128x1xf32>
    %c0_5 = arith.constant 0 : index
    %c0_6 = arith.constant 0 : index
    %7 = vector.load %arg4[%c0_5, %c0_6] : memref<128x1xf32, #tpu.memory_space<vmem>>, vector<128x1xf32>
    tpu.vector_store %arg4[%c0_5, %c0_6], %6 {strides = array<i32>} : memref<128x1xf32, #tpu.memory_space<vmem>>, vector<128x1xf32>,
    return
  }
  func.func @transform_0(%arg0: i32) -> (i32, i32) {
    %c0_i32 = arith.constant 0 : i32
    %c0_i32_0 = arith.constant 0 : i32
    return %arg0, %c0_i32 : i32, i32
  }
  func.func @transform_1(%arg0: i32) -> (i32, i32) {
    %c0_i32 = arith.constant 0 : i32
    %c0_i32_0 = arith.constant 0 : i32
    return %arg0, %c0_i32 : i32, i32
  }
  func.func @transform_2(%arg0: i32) -> (i32, i32) {
    %c0_i32 = arith.constant 0 : i32
    %c0_i32_0 = arith.constant 0 : i32
    return %arg0, %c0_i32 : i32, i32
  }
  func.func @transform_3(%arg0: i32) -> (i32, i32) {
    %c0_i32 = arith.constant 0 : i32
    %c0_i32_0 = arith.constant 0 : i32
    return %arg0, %c0_i32 : i32, i32
  }
}

</mosaic_0001>

<llo_original>
// kernel: _lambda_.1
$region0: #{_lambda_.1}
  #allocation0 [shape = 'u32[]', space=smem, size = 0x4, offset = 0x4, fixed_abs, tag = 'smem constant byte address 0x4 - core index']
  #allocation1 [shape = 'u32[72,128]{1,0:T(1,128)}', space=vmem, size = 0x9000, scoped, tag = 'internal scratch']
  %s0 = inlined_call_operand.vmem [shape: f32[128,32], index: 0, kind: input, shape index: {}]
  %s1 = inlined_call_operand.vmem [shape: f32[128,32], index: 1, kind: input, shape index: {}]
  %s2 = inlined_call_operand.vmem [shape: f32[128,1], index: 2, kind: input, shape index: {}]
  %s3 = inlined_call_operand.vmem [shape: f32[128,1], index: 3, kind: output, shape index: {}]
  %s4 = sld [smem:[#allocation0]]
  $region22: #{_lambda_.1} parent=0
    _
  %s6 = ssub.s32 1, %s4
  %s7 = scalar_select 0, %s6, %s4
  // Predicated region
  $region2: #{_lambda_.1} parent=0 // pred_check
    _
  $region3: #{_lambda_.1} parent=0 // pred_check_branch
    %9 = sbr.rel (0) target = $region5
  $region4: #{_lambda_.1} parent=0 // pred_region
    _
  $region5: #{_lambda_.1} parent=0 // pred_fallthru
    _
  // Predicated region
  $region6: #{_lambda_.1} parent=0 // pred_check
    _
  $region7: #{_lambda_.1} parent=0 // pred_check_branch
    %11 = sbr.rel (0) target = $region9
  $region8: #{_lambda_.1} parent=0 // pred_region
    _
  $region9: #{_lambda_.1} parent=0 // pred_fallthru
    _
  // Predicated region
  $region10: #{_lambda_.1} parent=0 // pred_check
    _
  $region11: #{_lambda_.1} parent=0 // pred_check_branch
    %13 = sbr.rel (0) target = $region13
  $region12: #{_lambda_.1} parent=0 // pred_region
    _
  $region13: #{_lambda_.1} parent=0 // pred_fallthru
    _
  %v14 = vld [vmem:[%s0] sm:$0xff]
  %v15 = vld [vmem:[%s0 + $0x8] sm:$0xff]
  %v16 = vld [vmem:[%s0 + $0x10] sm:$0xff]
  %v17 = vld [vmem:[%s0 + $0x18] sm:$0xff]
  %v18 = vld [vmem:[%s0 + $0x20] sm:$0xff]
  %v19 = vld [vmem:[%s0 + $0x28] sm:$0xff]
  %v20 = vld [vmem:[%s0 + $0x30] sm:$0xff]
  %v21 = vld [vmem:[%s0 + $0x38] sm:$0xff]
  %v22 = vld [vmem:[%s0 + $0x40] sm:$0xff]
  %v23 = vld [vmem:[%s0 + $0x48] sm:$0xff]
  %v24 = vld [vmem:[%s0 + $0x50] sm:$0xff]
  %v25 = vld [vmem:[%s0 + $0x58] sm:$0xff]
  %v26 = vld [vmem:[%s0 + $0x60] sm:$0xff]
  %v27 = vld [vmem:[%s0 + $0x68] sm:$0xff]
  %v28 = vld [vmem:[%s0 + $0x70] sm:$0xff]
  %v29 = vld [vmem:[%s0 + $0x78] sm:$0xff]
  %v30 = vld [vmem:[%s1] sm:$0xff]
  %v31 = vld [vmem:[%s1 + $0x8] sm:$0xff]
  %v32 = vld [vmem:[%s1 + $0x10] sm:$0xff]
  %v33 = vld [vmem:[%s1 + $0x18] sm:$0xff]
  %v34 = vld [vmem:[%s1 + $0x20] sm:$0xff]
  %v35 = vld [vmem:[%s1 + $0x28] sm:$0xff]
  %v36 = vld [vmem:[%s1 + $0x30] sm:$0xff]
  %v37 = vld [vmem:[%s1 + $0x38] sm:$0xff]
  %v38 = vld [vmem:[%s1 + $0x40] sm:$0xff]
  %v39 = vld [vmem:[%s1 + $0x48] sm:$0xff]
  %v40 = vld [vmem:[%s1 + $0x50] sm:$0xff]
  %v41 = vld [vmem:[%s1 + $0x58] sm:$0xff]
  %v42 = vld [vmem:[%s1 + $0x60] sm:$0xff]
  %v43 = vld [vmem:[%s1 + $0x68] sm:$0xff]
  %v44 = vld [vmem:[%s1 + $0x70] sm:$0xff]
  %v45 = vld [vmem:[%s1 + $0x78] sm:$0xff]
  %v46 = vmul.f32 %v14, %v30
  %v47 = vmul.f32 %v15, %v31
  %v48 = vmul.f32 %v16, %v32
  %v49 = vmul.f32 %v17, %v33
  %v50 = vmul.f32 %v18, %v34
  %v51 = vmul.f32 %v19, %v35
  %v52 = vmul.f32 %v20, %v36
  %v53 = vmul.f32 %v21, %v37
  %v54 = vmul.f32 %v22, %v38
  %v55 = vmul.f32 %v23, %v39
  %v56 = vmul.f32 %v24, %v40
  %v57 = vmul.f32 %v25, %v41
  %v58 = vmul.f32 %v26, %v42
  %v59 = vmul.f32 %v27, %v43
  %v60 = vmul.f32 %v28, %v44
  %v61 = vmul.f32 %v29, %v45
  %vm62 = vcmask 261120
  %v63 = vsel %vm62, %v46, 0.0
  %64 = vadd.xlane.f32.xlu0 %v63
  %v65 = vpop.xlane.xlu0 %64
  %v66 = vsel %vm62, %v47, 0.0
  %67 = vadd.xlane.f32.xlu0 %v66
  %v68 = vpop.xlane.xlu0 %67
  %v69 = vsel %vm62, %v48, 0.0
  %70 = vadd.xlane.f32.xlu0 %v69
  %v71 = vpop.xlane.xlu0 %70
  %v72 = vsel %vm62, %v49, 0.0
  %73 = vadd.xlane.f32.xlu0 %v72
  %v74 = vpop.xlane.xlu0 %73
  %v75 = vsel %vm62, %v50, 0.0
  %76 = vadd.xlane.f32.xlu0 %v75
  %v77 = vpop.xlane.xlu0 %76
  %v78 = vsel %vm62, %v51, 0.0
  %79 = vadd.xlane.f32.xlu0 %v78
  %v80 = vpop.xlane.xlu0 %79
  %v81 = vsel %vm62, %v52, 0.0
  %82 = vadd.xlane.f32.xlu0 %v81
  %v83 = vpop.xlane.xlu0 %82
  %v84 = vsel %vm62, %v53, 0.0
  %85 = vadd.xlane.f32.xlu0 %v84
  %v86 = vpop.xlane.xlu0 %85
  %v87 = vsel %vm62, %v54, 0.0
  %88 = vadd.xlane.f32.xlu0 %v87
  %v89 = vpop.xlane.xlu0 %88
  %v90 = vsel %vm62, %v55, 0.0
  %91 = vadd.xlane.f32.xlu0 %v90
  %v92 = vpop.xlane.xlu0 %91
  %v93 = vsel %vm62, %v56, 0.0
  %94 = vadd.xlane.f32.xlu0 %v93
  %v95 = vpop.xlane.xlu0 %94
  %v96 = vsel %vm62, %v57, 0.0
  %97 = vadd.xlane.f32.xlu0 %v96
  %v98 = vpop.xlane.xlu0 %97
  %v99 = vsel %vm62, %v58, 0.0
  %100 = vadd.xlane.f32.xlu0 %v99
  %v101 = vpop.xlane.xlu0 %100
  %v102 = vsel %vm62, %v59, 0.0
  %103 = vadd.xlane.f32.xlu0 %v102
  %v104 = vpop.xlane.xlu0 %103
  %v105 = vsel %vm62, %v60, 0.0
  %106 = vadd.xlane.f32.xlu0 %v105
  %v107 = vpop.xlane.xlu0 %106
  %v108 = vsel %vm62, %v61, 0.0
  %109 = vadd.xlane.f32.xlu0 %v108
  %v110 = vpop.xlane.xlu0 %109
  %v111 = vld [vmem:[%s2] sm:$0xff]
  %v112 = vld [vmem:[%s2 + $0x8] sm:$0xff]
  %v113 = vld [vmem:[%s2 + $0x10] sm:$0xff]
  %v114 = vld [vmem:[%s2 + $0x18] sm:$0xff]
  %v115 = vld [vmem:[%s2 + $0x20] sm:$0xff]
  %v116 = vld [vmem:[%s2 + $0x28] sm:$0xff]
  %v117 = vld [vmem:[%s2 + $0x30] sm:$0xff]
  %v118 = vld [vmem:[%s2 + $0x38] sm:$0xff]
  %v119 = vld [vmem:[%s2 + $0x40] sm:$0xff]
  %v120 = vld [vmem:[%s2 + $0x48] sm:$0xff]
  %v121 = vld [vmem:[%s2 + $0x50] sm:$0xff]
  %v122 = vld [vmem:[%s2 + $0x58] sm:$0xff]
  %v123 = vld [vmem:[%s2 + $0x60] sm:$0xff]
  %v124 = vld [vmem:[%s2 + $0x68] sm:$0xff]
  %v125 = vld [vmem:[%s2 + $0x70] sm:$0xff]
  %v126 = vld [vmem:[%s2 + $0x78] sm:$0xff]
  %v127 = vadd.f32 %v65, %v111
  %v128 = vadd.f32 %v68, %v112
  %v129 = vadd.f32 %v71, %v113
  %v130 = vadd.f32 %v74, %v114
  %v131 = vadd.f32 %v77, %v115
  %v132 = vadd.f32 %v80, %v116
  %v133 = vadd.f32 %v83, %v117
  %v134 = vadd.f32 %v86, %v118
  %v135 = vadd.f32 %v89, %v119
  %v136 = vadd.f32 %v92, %v120
  %v137 = vadd.f32 %v95, %v121
  %v138 = vadd.f32 %v98, %v122
  %v139 = vadd.f32 %v101, %v123
  %v140 = vadd.f32 %v104, %v124
  %v141 = vadd.f32 %v107, %v125
  %v142 = vadd.f32 %v110, %v126
  %vm143 = vcmask 7168
  %144 = vst.msk [vmem:[%s3] sm:$0xff] %vm143, %v127
  %145 = vst.msk [vmem:[%s3 + $0x8] sm:$0xff] %vm143, %v128
  %146 = vst.msk [vmem:[%s3 + $0x10] sm:$0xff] %vm143, %v129
  %147 = vst.msk [vmem:[%s3 + $0x18] sm:$0xff] %vm143, %v130
  %148 = vst.msk [vmem:[%s3 + $0x20] sm:$0xff] %vm143, %v131
  %149 = vst.msk [vmem:[%s3 + $0x28] sm:$0xff] %vm143, %v132
  %150 = vst.msk [vmem:[%s3 + $0x30] sm:$0xff] %vm143, %v133
  %151 = vst.msk [vmem:[%s3 + $0x38] sm:$0xff] %vm143, %v134
  %152 = vst.msk [vmem:[%s3 + $0x40] sm:$0xff] %vm143, %v135
  %153 = vst.msk [vmem:[%s3 + $0x48] sm:$0xff] %vm143, %v136
  %154 = vst.msk [vmem:[%s3 + $0x50] sm:$0xff] %vm143, %v137
  %155 = vst.msk [vmem:[%s3 + $0x58] sm:$0xff] %vm143, %v138
  %156 = vst.msk [vmem:[%s3 + $0x60] sm:$0xff] %vm143, %v139
  %157 = vst.msk [vmem:[%s3 + $0x68] sm:$0xff] %vm143, %v140
  %158 = vst.msk [vmem:[%s3 + $0x70] sm:$0xff] %vm143, %v141
  %159 = vst.msk [vmem:[%s3 + $0x78] sm:$0xff] %vm143, %v142
  // Predicated region
  $region14: #{_lambda_.1} parent=0 // pred_check
    _
  $region15: #{_lambda_.1} parent=0 // pred_check_branch
    %161 = sbr.rel (0) target = $region17
  $region16: #{_lambda_.1} parent=0 // pred_region
    _
  $region17: #{_lambda_.1} parent=0 // pred_fallthru
    _
  // Predicated region
  $region18: #{_lambda_.1} parent=0 // pred_check
    _
  $region19: #{_lambda_.1} parent=0 // pred_check_branch
    %163 = sbr.rel (0) target = $region21
  $region20: #{_lambda_.1} parent=0 // pred_region
    _
  $region21: #{_lambda_.1} parent=0 // pred_fallthru
    _

</llo_original>
